<compile_context>
chip_gen: v7x
topology: tpu7x:2x2x1
jax: 0.10.0
libtpu: 0.0.40
codegen_flags: <defaults>
</compile_context>

<pallas_src>
import functools
import math

import jax
import jax.numpy as jnp
from jax.experimental import pallas as pl
from jax.experimental.pallas import tpu as pltpu

_LANE = 1024           # lane width of the packed slab (half-splits stay 128-aligned)
_MAX_BLOCK_ROWS = 512  # (512, 1024) f32 tile = 2 MiB -> ~8 MiB double-buffered (v5e-safe)


def _box_muller(b1, b2, bitcast_fn):
    """Map two uint32 bit arrays to two independent standard-normal f32 arrays."""
    exp_one = jnp.uint32(0x3F800000)
    # Exponent-bit trick: fill the mantissa to get a float in [1, 2) without an
    # int->float convert or multiply.
    f1 = bitcast_fn((b1 >> 9) | exp_one)
    f2 = bitcast_fn((b2 >> 9) | exp_one)
    u1 = 2.0 - f1                       # (0, 1]  -> log() is finite
    u2 = f2 - 1.0                       # [0, 1)
    r = jnp.sqrt(-2.0 * jnp.log(u1))    # shared between both outputs
    theta = jnp.float32(2.0 * math.pi) * u2
    return r * jnp.cos(theta), r * jnp.sin(theta)


def _noise_kernel_tpu(seed_ref, x_ref, o_ref, *, sigma):
    # Per-tile seeding: deterministic under megacore "parallel" sharding, and the
    # multi-word seed decorrelates adjacent tile streams.
    pltpu.prng_seed(seed_ref[0], pl.program_id(0))
    rows, lanes = x_ref.shape
    half = lanes // 2
    # One pair of uniforms per TWO output elements (both Box-Muller branches used).
    b1 = pltpu.bitcast(pltpu.prng_random_bits((rows, half)), jnp.uint32)
    b2 = pltpu.bitcast(pltpu.prng_random_bits((rows, half)), jnp.uint32)
    z1, z2 = _box_muller(b1, b2, lambda v: pltpu.bitcast(v, jnp.float32))
    s = jnp.float32(sigma)
    o_ref[:, :half] = (x_ref[:, :half].astype(jnp.float32) + s * z1).astype(o_ref.dtype)
    o_ref[:, half:] = (x_ref[:, half:].astype(jnp.float32) + s * z2).astype(o_ref.dtype)


def _noise_kernel_bits(x_ref, b1_ref, b2_ref, o_ref, *, sigma):
    # Portable fallback: uniform bits are produced outside the kernel.
    half = b1_ref.shape[-1]
    z1, z2 = _box_muller(
        b1_ref[...], b2_ref[...],
        lambda v: jax.lax.bitcast_convert_type(v, jnp.float32))
    s = jnp.float32(sigma)
    o_ref[:, :half] = (x_ref[:, :half].astype(jnp.float32) + s * z1).astype(o_ref.dtype)
    o_ref[:, half:] = (x_ref[:, half:].astype(jnp.float32) + s * z2).astype(o_ref.dtype)


def gaussian_noise(x, sigma, seed, training=True):
    """Pallas equivalent of GaussianNoise.forward.

    x        : any-shaped array (e.g. NCHW activations)
    sigma    : python float, noise std-dev
    seed     : python int, PRNG seed (stands in for torch's global RNG state)
    training : if False, identity (matches nn.Module eval behaviour)
    """
    if not training:
        return x

    orig_shape = x.shape
    dtype = x.dtype
    n = x.size
    lane = _LANE
    half = lane // 2

    rows = pl.cdiv(n, lane)
    if rows <= _MAX_BLOCK_ROWS:
        rows_p = max(8, ((rows + 7) // 8) * 8)          # single block covers everything
        block_rows = rows_p
    else:
        rows_p = pl.cdiv(rows, _MAX_BLOCK_ROWS) * _MAX_BLOCK_ROWS
        block_rows = _MAX_BLOCK_ROWS
    n_pad = rows_p * lane

    flat = x.reshape(-1)
    if n_pad != n:                       # fast path skips the extra HBM pad pass
        flat = jnp.pad(flat, (0, n_pad - n))
    x2d = flat.reshape(rows_p, lane)
    grid = (rows_p // block_rows,)

    if jax.default_backend() == "tpu":
        seed_arr = jnp.asarray([seed], dtype=jnp.int32)
        out2d = pl.pallas_call(
            functools.partial(_noise_kernel_tpu, sigma=float(sigma)),
            out_shape=jax.ShapeDtypeStruct((rows_p, lane), dtype),
            grid_spec=pltpu.PrefetchScalarGridSpec(
                num_scalar_prefetch=1,
                grid=grid,
                in_specs=[pl.BlockSpec((block_rows, lane), lambda i, seed_ref: (i, 0))],
                out_specs=pl.BlockSpec((block_rows, lane), lambda i, seed_ref: (i, 0)),
            ),
            compiler_params=pltpu.CompilerParams(
                dimension_semantics=("parallel",),       # shard tiles across v7x's 2 TCs
            ),
            cost_estimate=pl.CostEstimate(
                flops=10 * n_pad,
                transcendentals=2 * n_pad,
                bytes_accessed=2 * n_pad * dtype.itemsize,
            ),
        )(seed_arr, x2d)
    else:
        # TODO(synk): pltpu.prng_* has no lowering off-TPU; on non-TPU backends we
        # feed uniform bits generated by jax.random into the same Box-Muller kernel.
        k1, k2 = jax.random.split(jax.random.PRNGKey(int(seed)))
        b1 = jax.random.bits(k1, (rows_p, half), dtype=jnp.uint32)
        b2 = jax.random.bits(k2, (rows_p, half), dtype=jnp.uint32)
        out2d = pl.pallas_call(
            functools.partial(_noise_kernel_bits, sigma=float(sigma)),
            out_shape=jax.ShapeDtypeStruct((rows_p, lane), dtype),
            grid=grid,
            in_specs=[pl.BlockSpec((block_rows, lane), lambda i: (i, 0)),
                      pl.BlockSpec((block_rows, half), lambda i: (i, 0)),
                      pl.BlockSpec((block_rows, half), lambda i: (i, 0))],
            out_specs=pl.BlockSpec((block_rows, lane), lambda i: (i, 0)),
            compiler_params=pltpu.CompilerParams(
                dimension_semantics=("parallel",),
            ),
        )(x2d, b1, b2)

    out = out2d.reshape(-1)
    if n_pad != n:
        out = out[:n]
    return out.reshape(orig_shape)


if __name__ == "__main__":
    key = jax.random.PRNGKey(0)
    # NCHW, as in PyTorch conv-style activations.
    x = jax.random.normal(key, (2, 4, 16, 16), dtype=jnp.float32)
    sigma = 0.1

    # Training mode: x + sigma * N(0, 1)
    y_train = gaussian_noise(x, sigma, seed=1234, training=True)
    y_train = jax.block_until_ready(y_train)
    assert y_train.shape == x.shape and y_train.dtype == x.dtype

    # Sanity: noise magnitude is on the order of sigma and roughly zero-mean.
    noise = y_train - x
    std = float(jnp.std(noise))
    mean = float(jnp.mean(noise))
    assert 0.05 < std < 0.2, f"unexpected noise std {std}"
    assert abs(mean) < 0.05, f"unexpected noise mean {mean}"

    # Eval mode: identity, exactly like the PyTorch module.
    y_eval = gaussian_noise(x, sigma, seed=1234, training=False)
    y_eval = jax.block_until_ready(y_eval)
    assert bool(jnp.all(y_eval == x))

    print("KERNEL_OK")
</pallas_src>

<mosaic_0001>
module attributes {stable_mosaic.version = 11 : i64} {
  func.func @_noise_kernel_bits(%arg0: i32, %arg1: memref<8x1024xf32, #tpu.memory_space<vmem>>, %arg2: memref<8x512xi32, #tpu.memory_space<vmem>>, %arg3: memref<8x512xi32, #tpu.memory_space<vmem>>, %arg4: memref<8x1024xf32, #tpu.memory_space<vmem>>) attributes {dimension_semantics = [#tpu.dimension_semantics<parallel>], iteration_bounds = array<i64: 1>, scalar_prefetch = 0 : i64, scratch_operands = 0 : i64, tpu.core_type = #tpu.core_type<tc>, window_params = [{transform_indices = @transform_0, window_bounds = array<i64: 8, 1024>}, {transform_indices = @transform_1, window_bounds = array<i64: 8, 512>}, {transform_indices = @transform_2, window_bounds = array<i64: 8, 512>}, {transform_indices = @transform_3, window_bounds = array<i64: 8, 1024>}]} {
    %c0 = arith.constant 0 : index
    %c0_0 = arith.constant 0 : index
    %0 = vector.load %arg2[%c0, %c0_0] : memref<8x512xi32, #tpu.memory_space<vmem>>, vector<8x512xi32>
    %c0_1 = arith.constant 0 : index
    %c0_2 = arith.constant 0 : index
    %1 = vector.load %arg3[%c0_1, %c0_2] : memref<8x512xi32, #tpu.memory_space<vmem>>, vector<8x512xi32>
    %c9_i32 = arith.constant 9 : i32
    %2 = vector.broadcast %c9_i32 : i32 to vector<8x512xi32>
    %3 = arith.shrui %0, %2 : vector<8x512xi32>
    %c1065353216_i32 = arith.constant 1065353216 : i32
    %4 = vector.broadcast %c1065353216_i32 : i32 to vector<8x512xi32>
    %5 = arith.ori %3, %4 : vector<8x512xi32>
    %6 = tpu.bitcast %5 : vector<8x512xi32> -> vector<8x512xf32>
    %c9_i32_3 = arith.constant 9 : i32
    %7 = vector.broadcast %c9_i32_3 : i32 to vector<8x512xi32>
    %8 = arith.shrui %1, %7 : vector<8x512xi32>
    %c1065353216_i32_4 = arith.constant 1065353216 : i32
    %9 = vector.broadcast %c1065353216_i32_4 : i32 to vector<8x512xi32>
    %10 = arith.ori %8, %9 : vector<8x512xi32>
    %11 = tpu.bitcast %10 : vector<8x512xi32> -> vector<8x512xf32>
    %cst = arith.constant 2.000000e+00 : f32
    %12 = vector.broadcast %cst : f32 to vector<8x512xf32>
    %13 = arith.subf %12, %6 : vector<8x512xf32>
    %cst_5 = arith.constant 1.000000e+00 : f32
    %14 = vector.broadcast %cst_5 : f32 to vector<8x512xf32>
    %15 = arith.subf %11, %14 : vector<8x512xf32>
    %16 = math.log %13 : vector<8x512xf32>
    %cst_6 = arith.constant -2.000000e+00 : f32
    %17 = vector.broadcast %cst_6 : f32 to vector<8x512xf32>
    %18 = arith.mulf %17, %16 : vector<8x512xf32>
    %19 = math.sqrt %18 : vector<8x512xf32>
    %cst_7 = arith.constant 6.28318548 : f32
    %20 = vector.broadcast %cst_7 : f32 to vector<8x512xf32>
    %21 = arith.mulf %20, %15 : vector<8x512xf32>
    %22 = math.cos %21 : vector<8x512xf32>
    %23 = arith.mulf %19, %22 : vector<8x512xf32>
    %24 = math.sin %21 : vector<8x512xf32>
    %25 = arith.mulf %19, %24 : vector<8x512xf32>
    %c0_8 = arith.constant 0 : index
    %c0_9 = arith.constant 0 : index
    %26 = vector.load %arg1[%c0_8, %c0_9] : memref<8x1024xf32, #tpu.memory_space<vmem>>, vector<8x512xf32>
    %cst_10 = arith.constant 1.000000e-01 : f32
    %27 = vector.broadcast %cst_10 : f32 to vector<8x512xf32>
    %28 = arith.mulf %27, %23 : vector<8x512xf32>
    %29 = arith.addf %26, %28 : vector<8x512xf32>
    %c0_11 = arith.constant 0 : index
    %c0_12 = arith.constant 0 : index
    %30 = vector.load %arg4[%c0_11, %c0_12] : memref<8x1024xf32, #tpu.memory_space<vmem>>, vector<8x512xf32>
    tpu.vector_store %arg4[%c0_11, %c0_12], %29 {strides = array<i32>} : memref<8x1024xf32, #tpu.memory_space<vmem>>, vector<8x512xf32>,
    %c0_13 = arith.constant 0 : index
    %c512 = arith.constant 512 : index
    %31 = vector.load %arg1[%c0_13, %c512] : memref<8x1024xf32, #tpu.memory_space<vmem>>, vector<8x512xf32>
    %cst_14 = arith.constant 1.000000e-01 : f32
    %32 = vector.broadcast %cst_14 : f32 to vector<8x512xf32>
    %33 = arith.mulf %32, %25 : vector<8x512xf32>
    %34 = arith.addf %31, %33 : vector<8x512xf32>
    %c0_15 = arith.constant 0 : index
    %c512_16 = arith.constant 512 : index
    %35 = vector.load %arg4[%c0_15, %c512_16] : memref<8x1024xf32, #tpu.memory_space<vmem>>, vector<8x512xf32>
    tpu.vector_store %arg4[%c0_15, %c512_16], %34 {strides = array<i32>} : memref<8x1024xf32, #tpu.memory_space<vmem>>, vector<8x512xf32>,
    return
  }
  func.func @transform_0(%arg0: i32) -> (i32, i32) {
    %c0_i32 = arith.constant 0 : i32
    %c0_i32_0 = arith.constant 0 : i32
    return %arg0, %c0_i32 : i32, i32
  }
  func.func @transform_1(%arg0: i32) -> (i32, i32) {
    %c0_i32 = arith.constant 0 : i32
    %c0_i32_0 = arith.constant 0 : i32
    return %arg0, %c0_i32 : i32, i32
  }
  func.func @transform_2(%arg0: i32) -> (i32, i32) {
    %c0_i32 = arith.constant 0 : i32
    %c0_i32_0 = arith.constant 0 : i32
    return %arg0, %c0_i32 : i32, i32
  }
  func.func @transform_3(%arg0: i32) -> (i32, i32) {
    %c0_i32 = arith.constant 0 : i32
    %c0_i32_0 = arith.constant 0 : i32
    return %arg0, %c0_i32 : i32, i32
  }
}

</mosaic_0001>

<llo_original>
// kernel: tpu_custom_call.1
$region0: #{tpu_custom_call.1}
  #allocation0 [shape = 'u32[]', space=smem, size = 0x4, offset = 0x4, fixed_abs, tag = 'smem constant byte address 0x4 - core index']
  #allocation1 [shape = 'u32[144,128]{1,0:T(1,128)}', space=vmem, size = 0x12000, scoped, tag = 'internal scratch']
  %s0 = inlined_call_operand.hbm [shape: f32[8,1024], index: 0, kind: input, shape index: {}]
  %s1 = inlined_call_operand.hbm [shape: u32[8,512], index: 1, kind: input, shape index: {}]
  %s2 = inlined_call_operand.hbm [shape: u32[8,512], index: 2, kind: input, shape index: {}]
  %s3 = inlined_call_operand.hbm [shape: f32[8,1024], index: 3, kind: output, shape index: {}]
  %s4 = sld [smem:[#allocation0]]
  $region34: #{tpu_custom_call.1} parent=0
    _
  %s6 = ssub.s32 1, %s4
  %s7 = scalar_select 0, %s6, %s4
  $region1: #{tpu_custom_call.1} parent=0
    #allocation2 [shape = 'u8[32768]{0}', space=vmem, size = 0x8000, scoped, tag = 'input window, operand 0, single buffered']
    #allocation3 [shape = 's32[1]{0}', space=sflag, size = 0x4, scoped, tag = 'scoped memory for tpu_custom_call.1']
    #allocation4 [shape = 's32[1]{0}', space=sflag, size = 0x4, scoped, tag = 'scoped memory for tpu_custom_call.1']
    #allocation5 [shape = 'u8[16384]{0}', space=vmem, size = 0x4000, scoped, tag = 'input window, operand 1, single buffered']
    #allocation6 [shape = 's32[1]{0}', space=sflag, size = 0x4, scoped, tag = 'scoped memory for tpu_custom_call.1']
    #allocation7 [shape = 'u8[16384]{0}', space=vmem, size = 0x4000, scoped, tag = 'input window, operand 2, single buffered']
    #allocation8 [shape = 'u8[32768]{0}', space=vmem, size = 0x8000, scoped, tag = 'output window, operand 0, single buffered']
    %8 = vsyncpa [#allocation3], 0
    %9 = vsyncpa [#allocation6], 0
    %10 = vsyncpa [#allocation4], 0
    // Predicated region
    $region2: #{tpu_custom_call.1} parent=1 // pred_check
      _
    $region3: #{tpu_custom_call.1} parent=1 // pred_check_branch
      %12 = sbr.rel (0) target = $region5
    $region4: #{tpu_custom_call.1} parent=1 // pred_region
      %s14 = ssub.s32 1024, 1024
      %15 = vsyncadd [#allocation3], %s14
      %s17 = sshll.u32 [#allocation2], 4
      %s18 = int_to_ptr.vmem [resolvable:$true] %s17
      %20 = dma.hbm_to_vmem [thread:$0]  %s0, 1024, %s18, [#allocation3]
    $region5: #{tpu_custom_call.1} parent=1 // pred_fallthru
      _
    // Predicated region
    $region6: #{tpu_custom_call.1} parent=1 // pred_check
      _
    $region7: #{tpu_custom_call.1} parent=1 // pred_check_branch
      %22 = sbr.rel (0) target = $region9
    $region8: #{tpu_custom_call.1} parent=1 // pred_region
      %s24 = ssub.s32 512, 512
      %25 = vsyncadd [#allocation6], %s24
      %s27 = sshll.u32 [#allocation5], 4
      %s28 = int_to_ptr.vmem [resolvable:$true] %s27
      %30 = dma.hbm_to_vmem [thread:$0]  %s1, 512, %s28, [#allocation6]
    $region9: #{tpu_custom_call.1} parent=1 // pred_fallthru
      _
    // Predicated region
    $region10: #{tpu_custom_call.1} parent=1 // pred_check
      _
    $region11: #{tpu_custom_call.1} parent=1 // pred_check_branch
      %32 = sbr.rel (0) target = $region13
    $region12: #{tpu_custom_call.1} parent=1 // pred_region
      %s34 = ssub.s32 512, 512
      %35 = vsyncadd [#allocation6], %s34
      %s37 = sshll.u32 [#allocation7], 4
      %s38 = int_to_ptr.vmem [resolvable:$true] %s37
      %40 = dma.hbm_to_vmem [thread:$0]  %s2, 512, %s38, [#allocation6]
    $region13: #{tpu_custom_call.1} parent=1 // pred_fallthru
      _
    // Predicated region
    $region14: #{tpu_custom_call.1} parent=1 // pred_check
      _
    $region15: #{tpu_custom_call.1} parent=1 // pred_check_branch
      %42 = sbr.rel (0) target = $region17
    $region16: #{tpu_custom_call.1} parent=1 // pred_region
      %43 = dma.done [#allocation3], 1024
    $region17: #{tpu_custom_call.1} parent=1 // pred_fallthru
      _
    // Predicated region
    $region18: #{tpu_custom_call.1} parent=1 // pred_check
      _
    $region19: #{tpu_custom_call.1} parent=1 // pred_check_branch
      %45 = sbr.rel (0) target = $region21
    $region20: #{tpu_custom_call.1} parent=1 // pred_region
      %46 = dma.done [#allocation6], 512
    $region21: #{tpu_custom_call.1} parent=1 // pred_fallthru
      _
    // Predicated region
    $region22: #{tpu_custom_call.1} parent=1 // pred_check
      _
    $region23: #{tpu_custom_call.1} parent=1 // pred_check_branch
      %48 = sbr.rel (0) target = $region25
    $region24: #{tpu_custom_call.1} parent=1 // pred_region
      %49 = dma.done [#allocation6], 512
    $region25: #{tpu_custom_call.1} parent=1 // pred_fallthru
      _
    %v50 = vld [vmem:[#allocation5] sm:$0xff]
    %v51 = vld [vmem:[#allocation5 + $0x8] sm:$0xff]
    %v52 = vld [vmem:[#allocation5 + $0x10] sm:$0xff]
    %v53 = vld [vmem:[#allocation5 + $0x18] sm:$0xff]
    %v54 = vld [vmem:[#allocation7] sm:$0xff]
    %v55 = vld [vmem:[#allocation7 + $0x8] sm:$0xff]
    %v56 = vld [vmem:[#allocation7 + $0x10] sm:$0xff]
    %v57 = vld [vmem:[#allocation7 + $0x18] sm:$0xff]
    %v58 = vshrl.u32 %v50, 9
    %v59 = vshrl.u32 %v51, 9
    %v60 = vshrl.u32 %v52, 9
    %v61 = vshrl.u32 %v53, 9
    %v62 = vor.u32 %v58, 1065353216
    %v63 = vor.u32 %v59, 1065353216
    %v64 = vor.u32 %v60, 1065353216
    %v65 = vor.u32 %v61, 1065353216
    %v70 = vshrl.u32 %v54, 9
    %v71 = vshrl.u32 %v55, 9
    %v72 = vshrl.u32 %v56, 9
    %v73 = vshrl.u32 %v57, 9
    %v74 = vor.u32 %v70, 1065353216
    %v75 = vor.u32 %v71, 1065353216
    %v76 = vor.u32 %v72, 1065353216
    %v77 = vor.u32 %v73, 1065353216
    %v82 = vsub.f32 2.0, %v62
    %v83 = vsub.f32 2.0, %v63
    %v84 = vsub.f32 2.0, %v64
    %v85 = vsub.f32 2.0, %v65
    %v86 = vsub.f32 %v74, 1.0
    %v87 = vsub.f32 %v75, 1.0
    %v88 = vsub.f32 %v76, 1.0
    %v89 = vsub.f32 %v77, 1.0
    %v90 = vlog2.pop %v82
    %v91 = vmul.f32 %v90, 0.6931472
    %v92 = vlog2.pop %v83
    %v93 = vmul.f32 %v92, 0.6931472
    %v94 = vlog2.pop %v84
    %v95 = vmul.f32 %v94, 0.6931472
    %v96 = vlog2.pop %v85
    %v97 = vmul.f32 %v96, 0.6931472
    %v98 = vmul.f32 %v91, -2.0
    %v99 = vmul.f32 %v93, -2.0
    %v100 = vmul.f32 %v95, -2.0
    %v101 = vmul.f32 %v97, -2.0
    %v102 = vrsqrt.pop %v98
    %v103 = vmul.f32 %v98, %v102
    %vm104 = vcmp.eq.f32.partialorder %v98, inf
    %v105 = vsel %vm104, %v98, %v103
    %vm106 = vcmp.eq.f32.partialorder %v98, 0.0
    %v107 = vand.u32 %v98, 2147483648
    %v108 = vsel %vm106, %v107, %v105
    %v109 = vrsqrt.pop %v99
    %v110 = vmul.f32 %v99, %v109
    %vm111 = vcmp.eq.f32.partialorder %v99, inf
    %v112 = vsel %vm111, %v99, %v110
    %vm113 = vcmp.eq.f32.partialorder %v99, 0.0
    %v114 = vand.u32 %v99, 2147483648
    %v115 = vsel %vm113, %v114, %v112
    %v116 = vrsqrt.pop %v100
    %v117 = vmul.f32 %v100, %v116
    %vm118 = vcmp.eq.f32.partialorder %v100, inf
    %v119 = vsel %vm118, %v100, %v117
    %vm120 = vcmp.eq.f32.partialorder %v100, 0.0
    %v121 = vand.u32 %v100, 2147483648
    %v122 = vsel %vm120, %v121, %v119
    %v123 = vrsqrt.pop %v101
    %v124 = vmul.f32 %v101, %v123
    %vm125 = vcmp.eq.f32.partialorder %v101, inf
    %v126 = vsel %vm125, %v101, %v124
    %vm127 = vcmp.eq.f32.partialorder %v101, 0.0
    %v128 = vand.u32 %v101, 2147483648
    %v129 = vsel %vm127, %v128, %v126
    %v130 = vmul.f32 %v86, 6.2831855
    %v131 = vmul.f32 %v87, 6.2831855
    %v132 = vmul.f32 %v88, 6.2831855
    %v133 = vmul.f32 %v89, 6.2831855
    %v134 = vand.u32 2147483647, %v130
    %vm135 = vcmp.le.f32.partialorder %v134, 0.7853982
    %vm136 = vcmp.lt.s32.totalorder %v130, 0
    %v137 = vand.u32 %v130, 2139095040
    %v138 = vshrl.u32 %v137, 23
    %v139 = vsub.s32 %v138, 127
    %v140 = vand.u32 2147483647, %v130
    %v141 = vand.u32 %v140, 8388607
    %v142 = vor.u32 %v141, 8388608
    %v143 = vsub.s32 0, %v142
    %v144 = vadd.s32 %v139, 1
    %vm145 = vcmp.gt.s32.totalorder %v144, 0
    %v146 = vsel %vm145, %v144, 0
    %v147 = vshrl.u32 %v146, 5
    %v148 = vand.u32 %v146, 31
    %v149 = vsub.s32 32, %v148
    %v150 = vshrl.u32 683565275, %v149
    %v151 = vshll.u32 683565275, %v148
    %v152 = vshrl.u32 2475754826, %v149
    %v153 = vor.u32 %v151, %v152
    %v154 = vshll.u32 2475754826, %v148
    %v155 = vshrl.u32 2131351028, %v149
    %v156 = vor.u32 %v154, %v155
    %v157 = vshll.u32 2131351028, %v148
    %v158 = vshrl.u32 2102212464, %v149
    %v159 = vor.u32 %v157, %v158
    %v160 = vshll.u32 2102212464, %v148
    %v161 = vshrl.u32 920167782, %v149
    %v162 = vor.u32 %v160, %v161
    %v163 = vshll.u32 920167782, %v148
    %v164 = vshrl.u32 1326507024, %v149
    %v165 = vor.u32 %v163, %v164
    %vm166 = vcmp.lt.s32.totalorder %v147, 1
    %vm167 = vcmp.lt.s32.totalorder %v147, 2
    %vm168 = vcmp.lt.s32.totalorder %v147, 3
    %vm169 = vcmp.lt.s32.totalorder %v147, 4
    %v170 = vsel %vm166, %v150, %v153
    %v171 = vsel %vm169, %v159, 2102212464
    %v172 = vsel %vm168, %v156, %v171
    %v173 = vsel %vm167, %v170, %v172
    %v174 = vsel %vm166, %v153, %v156
    %v175 = vsel %vm169, %v162, 920167782
    %v176 = vsel %vm168, %v159, %v175
    %v177 = vsel %vm167, %v174, %v176
    %v178 = vsel %vm166, %v156, %v159
    %v179 = vsel %vm169, %v165, 1326507024
    %v180 = vsel %vm168, %v162, %v179
    %v181 = vsel %vm167, %v178, %v180
    %v182 = vshll.u32 %v142, 8
    %v183 = vmul.u32.u64.compose %v182, %v181
    %v184 = vextract.low.u32 %v183
    %v185 = vextract.high.u32 %v183
    %v186 = vmul.u32.u64.compose %v182, %v177
    %v187 = vextract.low.u32 %v186
    %v188 = vextract.high.u32 %v186
    %v189 = vmul.u32 %v182, %v173
    %v190 = vadd.s32 %v185, %v187
    %vm191 = vc.u32 %v185, %v187
    %v192 = vadd.s32 %v188, 1
    %v193 = vsel %vm191, %v192, %v188
    %v194 = vadd.s32 %v189, %v193
    %v195 = vadd.s32 %v194, 536870912
    %v196 = vshrl.u32 %v195, 30
    %v197 = vshll.u32 %v196, 30
    %v198 = vsub.s32 %v194, %v197
    %vm199 = vcmp.lt.s32.totalorder %v198, 0
    %v200 = vsub.s32 0, %v198
    %v201 = vsel %vm199, %v200, %v198
    %v202 = vclz %v201
    %v203 = vsub.s32 %v202, 2
    %vm204 = vcmp.gt.s32.totalorder 0, %v203
    %v205 = vsel %vm204, 0, %v203
    %v206 = vsub.s32 32, %v205
    %v207 = vshll.u32 %v198, %v205
    %v208 = vshrl.u32 %v190, %v206
    %v209 = vor.u32 %v207, %v208
    %v210 = vsub.s32 4294967266, %v205
    %v211 = vadd.s32 %v210, 127
    %v212 = vshll.u32 %v211, 23
    %v213 = vor.u32 4788187, %v212
    %v214 = vand.u32 2147483647, %v213
    %v216 = vcvt.s32.f32 %v209
    %v217 = vmul.f32 %v216, %v214
    %v218 = vxor.u32 %v217, 2147483648
    %v219 = vsel %vm136, %v218, %v217
    %v220 = vsub.s32 4, %v196
    %v221 = vsel %vm136, %v220, %v196
    %v222 = vsel %vm135, %v130, %v219
    %v223 = vsel %vm135, 0, %v221
    %v224 = vcosq.f32.pop %v222
    %v225 = vsinq.f32.pop %v222
    %vm226 = vweird.f32 %v130
    %v227 = vand.u32 %v223, 3
    %vm228 = vcmp.lt.s32.totalorder %v227, 2
    %vm229 = vcmp.eq.s32.totalorder %v227, 0
    %v230 = vxor.u32 %v225, 2147483648
    %v231 = vsel %vm229, %v224, %v230
    %vm232 = vcmp.eq.s32.totalorder %v227, 2
    %v233 = vxor.u32 %v224, 2147483648
    %v234 = vsel %vm232, %v233, %v225
    %v235 = vsel %vm228, %v231, %v234
    %v236 = vsel %vm226, nan, %v235
    %v237 = vand.u32 2147483647, %v131
    %vm238 = vcmp.le.f32.partialorder %v237, 0.7853982
    %vm239 = vcmp.lt.s32.totalorder %v131, 0
    %v240 = vand.u32 %v131, 2139095040
    %v241 = vshrl.u32 %v240, 23
    %v242 = vsub.s32 %v241, 127
    %v243 = vand.u32 2147483647, %v131
    %v244 = vand.u32 %v243, 8388607
    %v245 = vor.u32 %v244, 8388608
    %v246 = vsub.s32 0, %v245
    %v247 = vadd.s32 %v242, 1
    %vm248 = vcmp.gt.s32.totalorder %v247, 0
    %v249 = vsel %vm248, %v247, 0
    %v250 = vshrl.u32 %v249, 5
    %v251 = vand.u32 %v249, 31
    %v252 = vsub.s32 32, %v251
    %v253 = vshrl.u32 683565275, %v252
    %v254 = vshll.u32 683565275, %v251
    %v255 = vshrl.u32 2475754826, %v252
    %v256 = vor.u32 %v254, %v255
    %v257 = vshll.u32 2475754826, %v251
    %v258 = vshrl.u32 2131351028, %v252
    %v259 = vor.u32 %v257, %v258
    %v260 = vshll.u32 2131351028, %v251
    %v261 = vshrl.u32 2102212464, %v252
    %v262 = vor.u32 %v260, %v261
    %v263 = vshll.u32 2102212464, %v251
    %v264 = vshrl.u32 920167782, %v252
    %v265 = vor.u32 %v263, %v264
    %v266 = vshll.u32 920167782, %v251
    %v267 = vshrl.u32 1326507024, %v252
    %v268 = vor.u32 %v266, %v267
    %vm269 = vcmp.lt.s32.totalorder %v250, 1
    %vm270 = vcmp.lt.s32.totalorder %v250, 2
    %vm271 = vcmp.lt.s32.totalorder %v250, 3
    %vm272 = vcmp.lt.s32.totalorder %v250, 4
    %v273 = vsel %vm269, %v253, %v256
    %v274 = vsel %vm272, %v262, 2102212464
    %v275 = vsel %vm271, %v259, %v274
    %v276 = vsel %vm270, %v273, %v275
    %v277 = vsel %vm269, %v256, %v259
    %v278 = vsel %vm272, %v265, 920167782
    %v279 = vsel %vm271, %v262, %v278
    %v280 = vsel %vm270, %v277, %v279
    %v281 = vsel %vm269, %v259, %v262
    %v282 = vsel %vm272, %v268, 1326507024
    %v283 = vsel %vm271, %v265, %v282
    %v284 = vsel %vm270, %v281, %v283
    %v285 = vshll.u32 %v245, 8
    %v286 = vmul.u32.u64.compose %v285, %v284
    %v287 = vextract.low.u32 %v286
    %v288 = vextract.high.u32 %v286
    %v289 = vmul.u32.u64.compose %v285, %v280
    %v290 = vextract.low.u32 %v289
    %v291 = vextract.high.u32 %v289
    %v292 = vmul.u32 %v285, %v276
    %v293 = vadd.s32 %v288, %v290
    %vm294 = vc.u32 %v288, %v290
    %v295 = vadd.s32 %v291, 1
    %v296 = vsel %vm294, %v295, %v291
    %v297 = vadd.s32 %v292, %v296
    %v298 = vadd.s32 %v297, 536870912
    %v299 = vshrl.u32 %v298, 30
    %v300 = vshll.u32 %v299, 30
    %v301 = vsub.s32 %v297, %v300
    %vm302 = vcmp.lt.s32.totalorder %v301, 0
    %v303 = vsub.s32 0, %v301
    %v304 = vsel %vm302, %v303, %v301
    %v305 = vclz %v304
    %v306 = vsub.s32 %v305, 2
    %vm307 = vcmp.gt.s32.totalorder 0, %v306
    %v308 = vsel %vm307, 0, %v306
    %v309 = vsub.s32 32, %v308
    %v310 = vshll.u32 %v301, %v308
    %v311 = vshrl.u32 %v293, %v309
    %v312 = vor.u32 %v310, %v311
    %v313 = vsub.s32 4294967266, %v308
    %v314 = vadd.s32 %v313, 127
    %v315 = vshll.u32 %v314, 23
    %v316 = vor.u32 4788187, %v315
    %v317 = vand.u32 2147483647, %v316
    %v319 = vcvt.s32.f32 %v312
    %v320 = vmul.f32 %v319, %v317
    %v321 = vxor.u32 %v320, 2147483648
    %v322 = vsel %vm239, %v321, %v320
    %v323 = vsub.s32 4, %v299
    %v324 = vsel %vm239, %v323, %v299
    %v325 = vsel %vm238, %v131, %v322
    %v326 = vsel %vm238, 0, %v324
    %v327 = vcosq.f32.pop %v325
    %v328 = vsinq.f32.pop %v325
    %vm329 = vweird.f32 %v131
    %v330 = vand.u32 %v326, 3
    %vm331 = vcmp.lt.s32.totalorder %v330, 2
    %vm332 = vcmp.eq.s32.totalorder %v330, 0
    %v333 = vxor.u32 %v328, 2147483648
    %v334 = vsel %vm332, %v327, %v333
    %vm335 = vcmp.eq.s32.totalorder %v330, 2
    %v336 = vxor.u32 %v327, 2147483648
    %v337 = vsel %vm335, %v336, %v328
    %v338 = vsel %vm331, %v334, %v337
    %v339 = vsel %vm329, nan, %v338
    %v340 = vand.u32 2147483647, %v132
    %vm341 = vcmp.le.f32.partialorder %v340, 0.7853982
    %vm342 = vcmp.lt.s32.totalorder %v132, 0
    %v343 = vand.u32 %v132, 2139095040
    %v344 = vshrl.u32 %v343, 23
    %v345 = vsub.s32 %v344, 127
    %v346 = vand.u32 2147483647, %v132
    %v347 = vand.u32 %v346, 8388607
    %v348 = vor.u32 %v347, 8388608
    %v349 = vsub.s32 0, %v348
    %v350 = vadd.s32 %v345, 1
    %vm351 = vcmp.gt.s32.totalorder %v350, 0
    %v352 = vsel %vm351, %v350, 0
    %v353 = vshrl.u32 %v352, 5
    %v354 = vand.u32 %v352, 31
    %v355 = vsub.s32 32, %v354
    %v356 = vshrl.u32 683565275, %v355
    %v357 = vshll.u32 683565275, %v354
    %v358 = vshrl.u32 2475754826, %v355
    %v359 = vor.u32 %v357, %v358
    %v360 = vshll.u32 2475754826, %v354
    %v361 = vshrl.u32 2131351028, %v355
    %v362 = vor.u32 %v360, %v361
    %v363 = vshll.u32 2131351028, %v354
    %v364 = vshrl.u32 2102212464, %v355
    %v365 = vor.u32 %v363, %v364
    %v366 = vshll.u32 2102212464, %v354
    %v367 = vshrl.u32 920167782, %v355
    %v368 = vor.u32 %v366, %v367
    %v369 = vshll.u32 920167782, %v354
    %v370 = vshrl.u32 1326507024, %v355
    %v371 = vor.u32 %v369, %v370
    %vm372 = vcmp.lt.s32.totalorder %v353, 1
    %vm373 = vcmp.lt.s32.totalorder %v353, 2
    %vm374 = vcmp.lt.s32.totalorder %v353, 3
    %vm375 = vcmp.lt.s32.totalorder %v353, 4
    %v376 = vsel %vm372, %v356, %v359
    %v377 = vsel %vm375, %v365, 2102212464
    %v378 = vsel %vm374, %v362, %v377
    %v379 = vsel %vm373, %v376, %v378
    %v380 = vsel %vm372, %v359, %v362
    %v381 = vsel %vm375, %v368, 920167782
    %v382 = vsel %vm374, %v365, %v381
    %v383 = vsel %vm373, %v380, %v382
    %v384 = vsel %vm372, %v362, %v365
    %v385 = vsel %vm375, %v371, 1326507024
    %v386 = vsel %vm374, %v368, %v385
    %v387 = vsel %vm373, %v384, %v386
    %v388 = vshll.u32 %v348, 8
    %v389 = vmul.u32.u64.compose %v388, %v387
    %v390 = vextract.low.u32 %v389
    %v391 = vextract.high.u32 %v389
    %v392 = vmul.u32.u64.compose %v388, %v383
    %v393 = vextract.low.u32 %v392
    %v394 = vextract.high.u32 %v392
    %v395 = vmul.u32 %v388, %v379
    %v396 = vadd.s32 %v391, %v393
    %vm397 = vc.u32 %v391, %v393
    %v398 = vadd.s32 %v394, 1
    %v399 = vsel %vm397, %v398, %v394
    %v400 = vadd.s32 %v395, %v399
    %v401 = vadd.s32 %v400, 536870912
    %v402 = vshrl.u32 %v401, 30
    %v403 = vshll.u32 %v402, 30
    %v404 = vsub.s32 %v400, %v403
    %vm405 = vcmp.lt.s32.totalorder %v404, 0
    %v406 = vsub.s32 0, %v404
    %v407 = vsel %vm405, %v406, %v404
    %v408 = vclz %v407
    %v409 = vsub.s32 %v408, 2
    %vm410 = vcmp.gt.s32.totalorder 0, %v409
    %v411 = vsel %vm410, 0, %v409
    %v412 = vsub.s32 32, %v411
    %v413 = vshll.u32 %v404, %v411
    %v414 = vshrl.u32 %v396, %v412
    %v415 = vor.u32 %v413, %v414
    %v416 = vsub.s32 4294967266, %v411
    %v417 = vadd.s32 %v416, 127
    %v418 = vshll.u32 %v417, 23
    %v419 = vor.u32 4788187, %v418
    %v420 = vand.u32 2147483647, %v419
    %v422 = vcvt.s32.f32 %v415
    %v423 = vmul.f32 %v422, %v420
    %v424 = vxor.u32 %v423, 2147483648
    %v425 = vsel %vm342, %v424, %v423
    %v426 = vsub.s32 4, %v402
    %v427 = vsel %vm342, %v426, %v402
    %v428 = vsel %vm341, %v132, %v425
    %v429 = vsel %vm341, 0, %v427
    %v430 = vcosq.f32.pop %v428
    %v431 = vsinq.f32.pop %v428
    %vm432 = vweird.f32 %v132
    %v433 = vand.u32 %v429, 3
    %vm434 = vcmp.lt.s32.totalorder %v433, 2
    %vm435 = vcmp.eq.s32.totalorder %v433, 0
    %v436 = vxor.u32 %v431, 2147483648
    %v437 = vsel %vm435, %v430, %v436
    %vm438 = vcmp.eq.s32.totalorder %v433, 2
    %v439 = vxor.u32 %v430, 2147483648
    %v440 = vsel %vm438, %v439, %v431
    %v441 = vsel %vm434, %v437, %v440
    %v442 = vsel %vm432, nan, %v441
    %v443 = vand.u32 2147483647, %v133
    %vm444 = vcmp.le.f32.partialorder %v443, 0.7853982
    %vm445 = vcmp.lt.s32.totalorder %v133, 0
    %v446 = vand.u32 %v133, 2139095040
    %v447 = vshrl.u32 %v446, 23
    %v448 = vsub.s32 %v447, 127
    %v449 = vand.u32 2147483647, %v133
    %v450 = vand.u32 %v449, 8388607
    %v451 = vor.u32 %v450, 8388608
    %v452 = vsub.s32 0, %v451
    %v453 = vadd.s32 %v448, 1
    %vm454 = vcmp.gt.s32.totalorder %v453, 0
    %v455 = vsel %vm454, %v453, 0
    %v456 = vshrl.u32 %v455, 5
    %v457 = vand.u32 %v455, 31
    %v458 = vsub.s32 32, %v457
    %v459 = vshrl.u32 683565275, %v458
    %v460 = vshll.u32 683565275, %v457
    %v461 = vshrl.u32 2475754826, %v458
    %v462 = vor.u32 %v460, %v461
    %v463 = vshll.u32 2475754826, %v457
    %v464 = vshrl.u32 2131351028, %v458
    %v465 = vor.u32 %v463, %v464
    %v466 = vshll.u32 2131351028, %v457
    %v467 = vshrl.u32 2102212464, %v458
    %v468 = vor.u32 %v466, %v467
    %v469 = vshll.u32 2102212464, %v457
    %v470 = vshrl.u32 920167782, %v458
    %v471 = vor.u32 %v469, %v470
    %v472 = vshll.u32 920167782, %v457
    %v473 = vshrl.u32 1326507024, %v458
    %v474 = vor.u32 %v472, %v473
    %vm475 = vcmp.lt.s32.totalorder %v456, 1
    %vm476 = vcmp.lt.s32.totalorder %v456, 2
    %vm477 = vcmp.lt.s32.totalorder %v456, 3
    %vm478 = vcmp.lt.s32.totalorder %v456, 4
    %v479 = vsel %vm475, %v459, %v462
    %v480 = vsel %vm478, %v468, 2102212464
    %v481 = vsel %vm477, %v465, %v480
    %v482 = vsel %vm476, %v479, %v481
    %v483 = vsel %vm475, %v462, %v465
    %v484 = vsel %vm478, %v471, 920167782
    %v485 = vsel %vm477, %v468, %v484
    %v486 = vsel %vm476, %v483, %v485
    %v487 = vsel %vm475, %v465, %v468
    %v488 = vsel %vm478, %v474, 1326507024
    %v489 = vsel %vm477, %v471, %v488
    %v490 = vsel %vm476, %v487, %v489
    %v491 = vshll.u32 %v451, 8
    %v492 = vmul.u32.u64.compose %v491, %v490
    %v493 = vextract.low.u32 %v492
    %v494 = vextract.high.u32 %v492
    %v495 = vmul.u32.u64.compose %v491, %v486
    %v496 = vextract.low.u32 %v495
    %v497 = vextract.high.u32 %v495
    %v498 = vmul.u32 %v491, %v482
    %v499 = vadd.s32 %v494, %v496
    %vm500 = vc.u32 %v494, %v496
    %v501 = vadd.s32 %v497, 1
    %v502 = vsel %vm500, %v501, %v497
    %v503 = vadd.s32 %v498, %v502
    %v504 = vadd.s32 %v503, 536870912
    %v505 = vshrl.u32 %v504, 30
    %v506 = vshll.u32 %v505, 30
    %v507 = vsub.s32 %v503, %v506
    %vm508 = vcmp.lt.s32.totalorder %v507, 0
    %v509 = vsub.s32 0, %v507
    %v510 = vsel %vm508, %v509, %v507
    %v511 = vclz %v510
    %v512 = vsub.s32 %v511, 2
    %vm513 = vcmp.gt.s32.totalorder 0, %v512
    %v514 = vsel %vm513, 0, %v512
    %v515 = vsub.s32 32, %v514
    %v516 = vshll.u32 %v507, %v514
    %v517 = vshrl.u32 %v499, %v515
    %v518 = vor.u32 %v516, %v517
    %v519 = vsub.s32 4294967266, %v514
    %v520 = vadd.s32 %v519, 127
    %v521 = vshll.u32 %v520, 23
    %v522 = vor.u32 4788187, %v521
    %v523 = vand.u32 2147483647, %v522
    %v525 = vcvt.s32.f32 %v518
    %v526 = vmul.f32 %v525, %v523
    %v527 = vxor.u32 %v526, 2147483648
    %v528 = vsel %vm445, %v527, %v526
    %v529 = vsub.s32 4, %v505
    %v530 = vsel %vm445, %v529, %v505
    %v531 = vsel %vm444, %v133, %v528
    %v532 = vsel %vm444, 0, %v530
    %v533 = vcosq.f32.pop %v531
    %v534 = vsinq.f32.pop %v531
    %vm535 = vweird.f32 %v133
    %v536 = vand.u32 %v532, 3
    %vm537 = vcmp.lt.s32.totalorder %v536, 2
    %vm538 = vcmp.eq.s32.totalorder %v536, 0
    %v539 = vxor.u32 %v534, 2147483648
    %v540 = vsel %vm538, %v533, %v539
    %vm541 = vcmp.eq.s32.totalorder %v536, 2
    %v542 = vxor.u32 %v533, 2147483648
    %v543 = vsel %vm541, %v542, %v534
    %v544 = vsel %vm537, %v540, %v543
    %v545 = vsel %vm535, nan, %v544
    %v546 = vmul.f32 %v108, %v236
    %v547 = vmul.f32 %v115, %v339
    %v548 = vmul.f32 %v122, %v442
    %v549 = vmul.f32 %v129, %v545
    %v550 = vand.u32 2147483647, %v130
    %vm551 = vcmp.le.f32.partialorder %v550, 0.7853982
    %vm552 = vcmp.lt.s32.totalorder %v130, 0
    %v553 = vand.u32 %v130, 2139095040
    %v554 = vshrl.u32 %v553, 23
    %v555 = vsub.s32 %v554, 127
    %v556 = vand.u32 2147483647, %v130
    %v557 = vand.u32 %v556, 8388607
    %v558 = vor.u32 %v557, 8388608
    %v559 = vsub.s32 0, %v558
    %v560 = vadd.s32 %v555, 1
    %vm561 = vcmp.gt.s32.totalorder %v560, 0
    %v562 = vsel %vm561, %v560, 0
    %v563 = vshrl.u32 %v562, 5
    %v564 = vand.u32 %v562, 31
    %v565 = vsub.s32 32, %v564
    %v566 = vshrl.u32 683565275, %v565
    %v567 = vshll.u32 683565275, %v564
    %v568 = vshrl.u32 2475754826, %v565
    %v569 = vor.u32 %v567, %v568
    %v570 = vshll.u32 2475754826, %v564
    %v571 = vshrl.u32 2131351028, %v565
    %v572 = vor.u32 %v570, %v571
    %v573 = vshll.u32 2131351028, %v564
    %v574 = vshrl.u32 2102212464, %v565
    %v575 = vor.u32 %v573, %v574
    %v576 = vshll.u32 2102212464, %v564
    %v577 = vshrl.u32 920167782, %v565
    %v578 = vor.u32 %v576, %v577
    %v579 = vshll.u32 920167782, %v564
    %v580 = vshrl.u32 1326507024, %v565
    %v581 = vor.u32 %v579, %v580
    %vm582 = vcmp.lt.s32.totalorder %v563, 1
    %vm583 = vcmp.lt.s32.totalorder %v563, 2
    %vm584 = vcmp.lt.s32.totalorder %v563, 3
    %vm585 = vcmp.lt.s32.totalorder %v563, 4
    %v586 = vsel %vm582, %v566, %v569
    %v587 = vsel %vm585, %v575, 2102212464
    %v588 = vsel %vm584, %v572, %v587
    %v589 = vsel %vm583, %v586, %v588
    %v590 = vsel %vm582, %v569, %v572
    %v591 = vsel %vm585, %v578, 920167782
    %v592 = vsel %vm584, %v575, %v591
    %v593 = vsel %vm583, %v590, %v592
    %v594 = vsel %vm582, %v572, %v575
    %v595 = vsel %vm585, %v581, 1326507024
    %v596 = vsel %vm584, %v578, %v595
    %v597 = vsel %vm583, %v594, %v596
    %v598 = vshll.u32 %v558, 8
    %v599 = vmul.u32.u64.compose %v598, %v597
    %v600 = vextract.low.u32 %v599
    %v601 = vextract.high.u32 %v599
    %v602 = vmul.u32.u64.compose %v598, %v593
    %v603 = vextract.low.u32 %v602
    %v604 = vextract.high.u32 %v602
    %v605 = vmul.u32 %v598, %v589
    %v606 = vadd.s32 %v601, %v603
    %vm607 = vc.u32 %v601, %v603
    %v608 = vadd.s32 %v604, 1
    %v609 = vsel %vm607, %v608, %v604
    %v610 = vadd.s32 %v605, %v609
    %v611 = vadd.s32 %v610, 536870912
    %v612 = vshrl.u32 %v611, 30
    %v613 = vshll.u32 %v612, 30
    %v614 = vsub.s32 %v610, %v613
    %vm615 = vcmp.lt.s32.totalorder %v614, 0
    %v616 = vsub.s32 0, %v614
    %v617 = vsel %vm615, %v616, %v614
    %v618 = vclz %v617
    %v619 = vsub.s32 %v618, 2
    %vm620 = vcmp.gt.s32.totalorder 0, %v619
    %v621 = vsel %vm620, 0, %v619
    %v622 = vsub.s32 32, %v621
    %v623 = vshll.u32 %v614, %v621
    %v624 = vshrl.u32 %v606, %v622
    %v625 = vor.u32 %v623, %v624
    %v626 = vsub.s32 4294967266, %v621
    %v627 = vadd.s32 %v626, 127
    %v628 = vshll.u32 %v627, 23
    %v629 = vor.u32 4788187, %v628
    %v630 = vand.u32 2147483647, %v629
    %v632 = vcvt.s32.f32 %v625
    %v633 = vmul.f32 %v632, %v630
    %v634 = vxor.u32 %v633, 2147483648
    %v635 = vsel %vm552, %v634, %v633
    %v636 = vsub.s32 4, %v612
    %v637 = vsel %vm552, %v636, %v612
    %v638 = vsel %vm551, %v130, %v635
    %v639 = vsel %vm551, 0, %v637
    %v640 = vcosq.f32.pop %v638
    %v641 = vsinq.f32.pop %v638
    %vm642 = vweird.f32 %v130
    %v643 = vadd.s32 %v639, 3
    %v644 = vand.u32 %v643, 3
    %vm645 = vcmp.lt.s32.totalorder %v644, 2
    %vm646 = vcmp.eq.s32.totalorder %v644, 0
    %v647 = vxor.u32 %v641, 2147483648
    %v648 = vsel %vm646, %v640, %v647
    %vm649 = vcmp.eq.s32.totalorder %v644, 2
    %v650 = vxor.u32 %v640, 2147483648
    %v651 = vsel %vm649, %v650, %v641
    %v652 = vsel %vm645, %v648, %v651
    %v653 = vsel %vm642, nan, %v652
    %v654 = vand.u32 2147483647, %v131
    %vm655 = vcmp.le.f32.partialorder %v654, 0.7853982
    %vm656 = vcmp.lt.s32.totalorder %v131, 0
    %v657 = vand.u32 %v131, 2139095040
    %v658 = vshrl.u32 %v657, 23
    %v659 = vsub.s32 %v658, 127
    %v660 = vand.u32 2147483647, %v131
    %v661 = vand.u32 %v660, 8388607
    %v662 = vor.u32 %v661, 8388608
    %v663 = vsub.s32 0, %v662
    %v664 = vadd.s32 %v659, 1
    %vm665 = vcmp.gt.s32.totalorder %v664, 0
    %v666 = vsel %vm665, %v664, 0
    %v667 = vshrl.u32 %v666, 5
    %v668 = vand.u32 %v666, 31
    %v669 = vsub.s32 32, %v668
    %v670 = vshrl.u32 683565275, %v669
    %v671 = vshll.u32 683565275, %v668
    %v672 = vshrl.u32 2475754826, %v669
    %v673 = vor.u32 %v671, %v672
    %v674 = vshll.u32 2475754826, %v668
    %v675 = vshrl.u32 2131351028, %v669
    %v676 = vor.u32 %v674, %v675
    %v677 = vshll.u32 2131351028, %v668
    %v678 = vshrl.u32 2102212464, %v669
    %v679 = vor.u32 %v677, %v678
    %v680 = vshll.u32 2102212464, %v668
    %v681 = vshrl.u32 920167782, %v669
    %v682 = vor.u32 %v680, %v681
    %v683 = vshll.u32 920167782, %v668
    %v684 = vshrl.u32 1326507024, %v669
    %v685 = vor.u32 %v683, %v684
    %vm686 = vcmp.lt.s32.totalorder %v667, 1
    %vm687 = vcmp.lt.s32.totalorder %v667, 2
    %vm688 = vcmp.lt.s32.totalorder %v667, 3
    %vm689 = vcmp.lt.s32.totalorder %v667, 4
    %v690 = vsel %vm686, %v670, %v673
    %v691 = vsel %vm689, %v679, 2102212464
    %v692 = vsel %vm688, %v676, %v691
    %v693 = vsel %vm687, %v690, %v692
    %v694 = vsel %vm686, %v673, %v676
    %v695 = vsel %vm689, %v682, 920167782
    %v696 = vsel %vm688, %v679, %v695
    %v697 = vsel %vm687, %v694, %v696
    %v698 = vsel %vm686, %v676, %v679
    %v699 = vsel %vm689, %v685, 1326507024
    %v700 = vsel %vm688, %v682, %v699
    %v701 = vsel %vm687, %v698, %v700
    %v702 = vshll.u32 %v662, 8
    %v703 = vmul.u32.u64.compose %v702, %v701
    %v704 = vextract.low.u32 %v703
    %v705 = vextract.high.u32 %v703
    %v706 = vmul.u32.u64.compose %v702, %v697
    %v707 = vextract.low.u32 %v706
    %v708 = vextract.high.u32 %v706
    %v709 = vmul.u32 %v702, %v693
    %v710 = vadd.s32 %v705, %v707
    %vm711 = vc.u32 %v705, %v707
    %v712 = vadd.s32 %v708, 1
    %v713 = vsel %vm711, %v712, %v708
    %v714 = vadd.s32 %v709, %v713
    %v715 = vadd.s32 %v714, 536870912
    %v716 = vshrl.u32 %v715, 30
    %v717 = vshll.u32 %v716, 30
    %v718 = vsub.s32 %v714, %v717
    %vm719 = vcmp.lt.s32.totalorder %v718, 0
    %v720 = vsub.s32 0, %v718
    %v721 = vsel %vm719, %v720, %v718
    %v722 = vclz %v721
    %v723 = vsub.s32 %v722, 2
    %vm724 = vcmp.gt.s32.totalorder 0, %v723
    %v725 = vsel %vm724, 0, %v723
    %v726 = vsub.s32 32, %v725
    %v727 = vshll.u32 %v718, %v725
    %v728 = vshrl.u32 %v710, %v726
    %v729 = vor.u32 %v727, %v728
    %v730 = vsub.s32 4294967266, %v725
    %v731 = vadd.s32 %v730, 127
    %v732 = vshll.u32 %v731, 23
    %v733 = vor.u32 4788187, %v732
    %v734 = vand.u32 2147483647, %v733
    %v736 = vcvt.s32.f32 %v729
    %v737 = vmul.f32 %v736, %v734
    %v738 = vxor.u32 %v737, 2147483648
    %v739 = vsel %vm656, %v738, %v737
    %v740 = vsub.s32 4, %v716
    %v741 = vsel %vm656, %v740, %v716
    %v742 = vsel %vm655, %v131, %v739
    %v743 = vsel %vm655, 0, %v741
    %v744 = vcosq.f32.pop %v742
    %v745 = vsinq.f32.pop %v742
    %vm746 = vweird.f32 %v131
    %v747 = vadd.s32 %v743, 3
    %v748 = vand.u32 %v747, 3
    %vm749 = vcmp.lt.s32.totalorder %v748, 2
    %vm750 = vcmp.eq.s32.totalorder %v748, 0
    %v751 = vxor.u32 %v745, 2147483648
    %v752 = vsel %vm750, %v744, %v751
    %vm753 = vcmp.eq.s32.totalorder %v748, 2
    %v754 = vxor.u32 %v744, 2147483648
    %v755 = vsel %vm753, %v754, %v745
    %v756 = vsel %vm749, %v752, %v755
    %v757 = vsel %vm746, nan, %v756
    %v758 = vand.u32 2147483647, %v132
    %vm759 = vcmp.le.f32.partialorder %v758, 0.7853982
    %vm760 = vcmp.lt.s32.totalorder %v132, 0
    %v761 = vand.u32 %v132, 2139095040
    %v762 = vshrl.u32 %v761, 23
    %v763 = vsub.s32 %v762, 127
    %v764 = vand.u32 2147483647, %v132
    %v765 = vand.u32 %v764, 8388607
    %v766 = vor.u32 %v765, 8388608
    %v767 = vsub.s32 0, %v766
    %v768 = vadd.s32 %v763, 1
    %vm769 = vcmp.gt.s32.totalorder %v768, 0
    %v770 = vsel %vm769, %v768, 0
    %v771 = vshrl.u32 %v770, 5
    %v772 = vand.u32 %v770, 31
    %v773 = vsub.s32 32, %v772
    %v774 = vshrl.u32 683565275, %v773
    %v775 = vshll.u32 683565275, %v772
    %v776 = vshrl.u32 2475754826, %v773
    %v777 = vor.u32 %v775, %v776
    %v778 = vshll.u32 2475754826, %v772
    %v779 = vshrl.u32 2131351028, %v773
    %v780 = vor.u32 %v778, %v779
    %v781 = vshll.u32 2131351028, %v772
    %v782 = vshrl.u32 2102212464, %v773
    %v783 = vor.u32 %v781, %v782
    %v784 = vshll.u32 2102212464, %v772
    %v785 = vshrl.u32 920167782, %v773
    %v786 = vor.u32 %v784, %v785
    %v787 = vshll.u32 920167782, %v772
    %v788 = vshrl.u32 1326507024, %v773
    %v789 = vor.u32 %v787, %v788
    %vm790 = vcmp.lt.s32.totalorder %v771, 1
    %vm791 = vcmp.lt.s32.totalorder %v771, 2
    %vm792 = vcmp.lt.s32.totalorder %v771, 3
    %vm793 = vcmp.lt.s32.totalorder %v771, 4
    %v794 = vsel %vm790, %v774, %v777
    %v795 = vsel %vm793, %v783, 2102212464
    %v796 = vsel %vm792, %v780, %v795
    %v797 = vsel %vm791, %v794, %v796
    %v798 = vsel %vm790, %v777, %v780
    %v799 = vsel %vm793, %v786, 920167782
    %v800 = vsel %vm792, %v783, %v799
    %v801 = vsel %vm791, %v798, %v800
    %v802 = vsel %vm790, %v780, %v783
    %v803 = vsel %vm793, %v789, 1326507024
    %v804 = vsel %vm792, %v786, %v803
    %v805 = vsel %vm791, %v802, %v804
    %v806 = vshll.u32 %v766, 8
    %v807 = vmul.u32.u64.compose %v806, %v805
    %v808 = vextract.low.u32 %v807
    %v809 = vextract.high.u32 %v807
    %v810 = vmul.u32.u64.compose %v806, %v801
    %v811 = vextract.low.u32 %v810
    %v812 = vextract.high.u32 %v810
    %v813 = vmul.u32 %v806, %v797
    %v814 = vadd.s32 %v809, %v811
    %vm815 = vc.u32 %v809, %v811
    %v816 = vadd.s32 %v812, 1
    %v817 = vsel %vm815, %v816, %v812
    %v818 = vadd.s32 %v813, %v817
    %v819 = vadd.s32 %v818, 536870912
    %v820 = vshrl.u32 %v819, 30
    %v821 = vshll.u32 %v820, 30
    %v822 = vsub.s32 %v818, %v821
    %vm823 = vcmp.lt.s32.totalorder %v822, 0
    %v824 = vsub.s32 0, %v822
    %v825 = vsel %vm823, %v824, %v822
    %v826 = vclz %v825
    %v827 = vsub.s32 %v826, 2
    %vm828 = vcmp.gt.s32.totalorder 0, %v827
    %v829 = vsel %vm828, 0, %v827
    %v830 = vsub.s32 32, %v829
    %v831 = vshll.u32 %v822, %v829
    %v832 = vshrl.u32 %v814, %v830
    %v833 = vor.u32 %v831, %v832
    %v834 = vsub.s32 4294967266, %v829
    %v835 = vadd.s32 %v834, 127
    %v836 = vshll.u32 %v835, 23
    %v837 = vor.u32 4788187, %v836
    %v838 = vand.u32 2147483647, %v837
    %v840 = vcvt.s32.f32 %v833
    %v841 = vmul.f32 %v840, %v838
    %v842 = vxor.u32 %v841, 2147483648
    %v843 = vsel %vm760, %v842, %v841
    %v844 = vsub.s32 4, %v820
    %v845 = vsel %vm760, %v844, %v820
    %v846 = vsel %vm759, %v132, %v843
    %v847 = vsel %vm759, 0, %v845
    %v848 = vcosq.f32.pop %v846
    %v849 = vsinq.f32.pop %v846
    %vm850 = vweird.f32 %v132
    %v851 = vadd.s32 %v847, 3
    %v852 = vand.u32 %v851, 3
    %vm853 = vcmp.lt.s32.totalorder %v852, 2
    %vm854 = vcmp.eq.s32.totalorder %v852, 0
    %v855 = vxor.u32 %v849, 2147483648
    %v856 = vsel %vm854, %v848, %v855
    %vm857 = vcmp.eq.s32.totalorder %v852, 2
    %v858 = vxor.u32 %v848, 2147483648
    %v859 = vsel %vm857, %v858, %v849
    %v860 = vsel %vm853, %v856, %v859
    %v861 = vsel %vm850, nan, %v860
    %v862 = vand.u32 2147483647, %v133
    %vm863 = vcmp.le.f32.partialorder %v862, 0.7853982
    %vm864 = vcmp.lt.s32.totalorder %v133, 0
    %v865 = vand.u32 %v133, 2139095040
    %v866 = vshrl.u32 %v865, 23
    %v867 = vsub.s32 %v866, 127
    %v868 = vand.u32 2147483647, %v133
    %v869 = vand.u32 %v868, 8388607
    %v870 = vor.u32 %v869, 8388608
    %v871 = vsub.s32 0, %v870
    %v872 = vadd.s32 %v867, 1
    %vm873 = vcmp.gt.s32.totalorder %v872, 0
    %v874 = vsel %vm873, %v872, 0
    %v875 = vshrl.u32 %v874, 5
    %v876 = vand.u32 %v874, 31
    %v877 = vsub.s32 32, %v876
    %v878 = vshrl.u32 683565275, %v877
    %v879 = vshll.u32 683565275, %v876
    %v880 = vshrl.u32 2475754826, %v877
    %v881 = vor.u32 %v879, %v880
    %v882 = vshll.u32 2475754826, %v876
    %v883 = vshrl.u32 2131351028, %v877
    %v884 = vor.u32 %v882, %v883
    %v885 = vshll.u32 2131351028, %v876
    %v886 = vshrl.u32 2102212464, %v877
    %v887 = vor.u32 %v885, %v886
    %v888 = vshll.u32 2102212464, %v876
    %v889 = vshrl.u32 920167782, %v877
    %v890 = vor.u32 %v888, %v889
    %v891 = vshll.u32 920167782, %v876
    %v892 = vshrl.u32 1326507024, %v877
    %v893 = vor.u32 %v891, %v892
    %vm894 = vcmp.lt.s32.totalorder %v875, 1
    %vm895 = vcmp.lt.s32.totalorder %v875, 2
    %vm896 = vcmp.lt.s32.totalorder %v875, 3
    %vm897 = vcmp.lt.s32.totalorder %v875, 4
    %v898 = vsel %vm894, %v878, %v881
    %v899 = vsel %vm897, %v887, 2102212464
    %v900 = vsel %vm896, %v884, %v899
    %v901 = vsel %vm895, %v898, %v900
    %v902 = vsel %vm894, %v881, %v884
    %v903 = vsel %vm897, %v890, 920167782
    %v904 = vsel %vm896, %v887, %v903
    %v905 = vsel %vm895, %v902, %v904
    %v906 = vsel %vm894, %v884, %v887
    %v907 = vsel %vm897, %v893, 1326507024
    %v908 = vsel %vm896, %v890, %v907
    %v909 = vsel %vm895, %v906, %v908
    %v910 = vshll.u32 %v870, 8
    %v911 = vmul.u32.u64.compose %v910, %v909
    %v912 = vextract.low.u32 %v911
    %v913 = vextract.high.u32 %v911
    %v914 = vmul.u32.u64.compose %v910, %v905
    %v915 = vextract.low.u32 %v914
    %v916 = vextract.high.u32 %v914
    %v917 = vmul.u32 %v910, %v901
    %v918 = vadd.s32 %v913, %v915
    %vm919 = vc.u32 %v913, %v915
    %v920 = vadd.s32 %v916, 1
    %v921 = vsel %vm919, %v920, %v916
    %v922 = vadd.s32 %v917, %v921
    %v923 = vadd.s32 %v922, 536870912
    %v924 = vshrl.u32 %v923, 30
    %v925 = vshll.u32 %v924, 30
    %v926 = vsub.s32 %v922, %v925
    %vm927 = vcmp.lt.s32.totalorder %v926, 0
    %v928 = vsub.s32 0, %v926
    %v929 = vsel %vm927, %v928, %v926
    %v930 = vclz %v929
    %v931 = vsub.s32 %v930, 2
    %vm932 = vcmp.gt.s32.totalorder 0, %v931
    %v933 = vsel %vm932, 0, %v931
    %v934 = vsub.s32 32, %v933
    %v935 = vshll.u32 %v926, %v933
    %v936 = vshrl.u32 %v918, %v934
    %v937 = vor.u32 %v935, %v936
    %v938 = vsub.s32 4294967266, %v933
    %v939 = vadd.s32 %v938, 127
    %v940 = vshll.u32 %v939, 23
    %v941 = vor.u32 4788187, %v940
    %v942 = vand.u32 2147483647, %v941
    %v944 = vcvt.s32.f32 %v937
    %v945 = vmul.f32 %v944, %v942
    %v946 = vxor.u32 %v945, 2147483648
    %v947 = vsel %vm864, %v946, %v945
    %v948 = vsub.s32 4, %v924
    %v949 = vsel %vm864, %v948, %v924
    %v950 = vsel %vm863, %v133, %v947
    %v951 = vsel %vm863, 0, %v949
    %v952 = vcosq.f32.pop %v950
    %v953 = vsinq.f32.pop %v950
    %vm954 = vweird.f32 %v133
    %v955 = vadd.s32 %v951, 3
    %v956 = vand.u32 %v955, 3
    %vm957 = vcmp.lt.s32.totalorder %v956, 2
    %vm958 = vcmp.eq.s32.totalorder %v956, 0
    %v959 = vxor.u32 %v953, 2147483648
    %v960 = vsel %vm958, %v952, %v959
    %vm961 = vcmp.eq.s32.totalorder %v956, 2
    %v962 = vxor.u32 %v952, 2147483648
    %v963 = vsel %vm961, %v962, %v953
    %v964 = vsel %vm957, %v960, %v963
    %v965 = vsel %vm954, nan, %v964
    %v966 = vmul.f32 %v108, %v653
    %v967 = vmul.f32 %v115, %v757
    %v968 = vmul.f32 %v122, %v861
    %v969 = vmul.f32 %v129, %v965
    %v970 = vld [vmem:[#allocation2] sm:$0xff]
    %v971 = vld [vmem:[#allocation2 + $0x8] sm:$0xff]
    %v972 = vld [vmem:[#allocation2 + $0x10] sm:$0xff]
    %v973 = vld [vmem:[#allocation2 + $0x18] sm:$0xff]
    %v974 = vmul.f32 %v546, 0.1
    %v975 = vmul.f32 %v547, 0.1
    %v976 = vmul.f32 %v548, 0.1
    %v977 = vmul.f32 %v549, 0.1
    %v978 = vadd.f32 %v970, %v974
    %v979 = vadd.f32 %v971, %v975
    %v980 = vadd.f32 %v972, %v976
    %v981 = vadd.f32 %v973, %v977
    %982 = vst [vmem:[#allocation8] sm:$0xff] %v978
    %983 = vst [vmem:[#allocation8 + $0x8] sm:$0xff] %v979
    %984 = vst [vmem:[#allocation8 + $0x10] sm:$0xff] %v980
    %985 = vst [vmem:[#allocation8 + $0x18] sm:$0xff] %v981
    %v986 = vld [vmem:[#allocation2 + $0x20] sm:$0xff]
    %v987 = vld [vmem:[#allocation2 + $0x28] sm:$0xff]
    %v988 = vld [vmem:[#allocation2 + $0x30] sm:$0xff]
    %v989 = vld [vmem:[#allocation2 + $0x38] sm:$0xff]
    %v990 = vmul.f32 %v966, 0.1
    %v991 = vmul.f32 %v967, 0.1
    %v992 = vmul.f32 %v968, 0.1
    %v993 = vmul.f32 %v969, 0.1
    %v994 = vadd.f32 %v986, %v990
    %v995 = vadd.f32 %v987, %v991
    %v996 = vadd.f32 %v988, %v992
    %v997 = vadd.f32 %v989, %v993
    %998 = vst [vmem:[#allocation8 + $0x20] sm:$0xff] %v994
    %999 = vst [vmem:[#allocation8 + $0x28] sm:$0xff] %v995
    %1000 = vst [vmem:[#allocation8 + $0x30] sm:$0xff] %v996
    %1001 = vst [vmem:[#allocation8 + $0x38] sm:$0xff] %v997
    // Predicated region
    $region26: #{tpu_custom_call.1} parent=1 // pred_check
      _
    $region27: #{tpu_custom_call.1} parent=1 // pred_check_branch
      %1003 = sbr.rel (0) target = $region29
    $region28: #{tpu_custom_call.1} parent=1 // pred_region
      %s1005 = ssub.s32 1024, 1024
      %1006 = vsyncadd [#allocation4], %s1005
      %s1008 = sshll.u32 [#allocation8], 4
      %s1009 = int_to_ptr.vmem [resolvable:$true] %s1008
      %1011 = dma.vmem_to_hbm [thread:$0]  %s1009, 1024, %s3, [#allocation4]
    $region29: #{tpu_custom_call.1} parent=1 // pred_fallthru
      _
    // Predicated region
    $region30: #{tpu_custom_call.1} parent=1 // pred_check
      _
    $region31: #{tpu_custom_call.1} parent=1 // pred_check_branch
      %1013 = sbr.rel (0) target = $region33
    $region32: #{tpu_custom_call.1} parent=1 // pred_region
      %1014 = dma.done [#allocation4], 1024
    $region33: #{tpu_custom_call.1} parent=1 // pred_fallthru
      _
    %1015 = vsyncpa [#allocation3], 1
    %1016 = vsyncpa [#allocation6], 1
    %1017 = vsyncpa [#allocation4], 1

</llo_original>
